<compile_context>
chip_gen: v7x
topology: tpu7x:2x2x1
jax: 0.10.0
libtpu: 0.0.40
codegen_flags: <defaults>
</compile_context>

<pallas_src>
import jax
import jax.numpy as jnp
from jax.experimental import pallas as pl
from jax.experimental.pallas import tpu as pltpu


_LANES = 128                            # vreg lane width
_TARGET_BLOCK_BYTES = 4 * 1024 * 1024   # ~4 MiB per input block
_MIN_KERNEL_BYTES = 1 * 1024 * 1024     # below this, plain jnp fast path


def _round_up(a, b):
    return -(-a // b) * b


def _lj_kernel(sigma_ref, eps_ref, x_ref, o_ref):
    # scalar parameters from SMEM
    sigma = sigma_ref[0]
    c = 4.0 * eps_ref[0]                       # fold 4*eps into one scalar

    # compute in f32 regardless of input dtype; cast back on the store
    r = x_ref[...].astype(jnp.float32)
    inv = sigma / r                            # (sigma/r)
    inv2 = inv * inv
    inv6 = inv2 * inv2 * inv2                  # (sigma/r)**6
    # 4*eps*((sigma/r)**12 - (sigma/r)**6) == c * inv6 * (inv6 - 1)
    o_ref[...] = (c * inv6 * (inv6 - 1.0)).astype(o_ref.dtype)


def _lj_jnp(x, sigma, epsilon):
    """Plain-jnp fallback (tiny inputs / ragged tails)."""
    xf = x.astype(jnp.float32)
    s = sigma.astype(jnp.float32)[0]
    e = epsilon.astype(jnp.float32)[0]
    inv = s / xf
    inv6 = (inv * inv) ** 3
    return (4.0 * e * (inv6 * inv6 - inv6)).astype(x.dtype)


def lennard_jones(x, sigma, epsilon, *,
                  target_block_bytes=_TARGET_BLOCK_BYTES,
                  min_kernel_bytes=_MIN_KERNEL_BYTES):
    """Elementwise LJ(x) = 4*eps*((sigma/x)^12 - (sigma/x)^6).

    x: any shape, float dtype.  sigma, epsilon: shape (1,) parameters.
    """
    orig_shape = x.shape
    orig_dtype = x.dtype
    n = x.size
    itemsize = jnp.dtype(orig_dtype).itemsize

    # --- small-input fast path: pallas_call launch overhead dominates ------
    if n * itemsize < min_kernel_bytes or n < _LANES:
        return _lj_jnp(x, sigma, epsilon)

    cols = _LANES
    rows = n // cols                 # lane-aligned prefix rows
    n_aligned = rows * cols
    tail = n - n_aligned

    # sublane packing multiple for the block's second-minor dim
    sub = {1: 32, 2: 16}.get(itemsize, 8)

    # --- tile choice --------------------------------------------------------
    # ~target_block_bytes per input block, dtype-scaled so DMA size (and
    # per-step overhead amortization) stays constant across f32 / bf16.
    tile_rows = max(sub, target_block_bytes // (cols * itemsize))

    # Guarantee >= 2 blocks on anything bigger than a couple of MiB so the
    # "parallel" row axis can actually shard across v7x's two TensorCores.
    slab_bytes = rows * cols * itemsize
    if slab_bytes > 2 * 1024 * 1024:
        half = _round_up(pl.cdiv(rows, 2), sub)
        tile_rows = min(tile_rows, half)

    if tile_rows >= rows:
        tile_rows = rows                          # single full-slab block
    else:
        tile_rows = min(_round_up(tile_rows, sub), rows)

    grid_rows = pl.cdiv(rows, tile_rows)

    # Explicit VMEM budget: 2 input + 2 output buffers of one block each,
    # plus headroom.  Stays well under v7x's 64 MiB/TC and above v5e's
    # 16 MiB scoped default.
    block_bytes = tile_rows * cols * itemsize
    vmem_limit = int(4 * block_bytes * 1.25) + (2 << 20)
    vmem_limit = max(16 << 20, min(vmem_limit, 48 << 20))

    x_flat = x.reshape(-1)
    x2d = x_flat[:n_aligned].reshape(rows, cols)   # aligned prefix, no pad

    out2d = pl.pallas_call(
        _lj_kernel,
        out_shape=jax.ShapeDtypeStruct((rows, cols), orig_dtype),
        grid_spec=pltpu.PrefetchScalarGridSpec(
            num_scalar_prefetch=0,
            grid=(grid_rows,),
            in_specs=[
                pl.BlockSpec(memory_space=pltpu.MemorySpace.SMEM),  # sigma (1,)
                pl.BlockSpec(memory_space=pltpu.MemorySpace.SMEM),  # eps (1,)
                pl.BlockSpec((tile_rows, cols), lambda i: (i, 0)),  # x tile
            ],
            out_specs=pl.BlockSpec((tile_rows, cols), lambda i: (i, 0)),
        ),
        compiler_params=pltpu.CompilerParams(
            # row axis is independent -> shardable across TensorCores (v7x)
            dimension_semantics=("parallel",),
            vmem_limit_bytes=vmem_limit,
        ),
    )(sigma.astype(jnp.float32), epsilon.astype(jnp.float32), x2d)

    out_flat = out2d.reshape(-1)
    if tail:
        # <128-element ragged tail: compute with plain jnp, no pad/slice copies
        tail_out = _lj_jnp(x_flat[n_aligned:], sigma, epsilon)
        out_flat = jnp.concatenate([out_flat, tail_out])
    return out_flat.reshape(orig_shape)


def lennard_jones_ref(x, sigma, epsilon):
    s = sigma[0]
    e = epsilon[0]
    return 4.0 * e * ((s / x) ** 12 - (s / x) ** 6)


if __name__ == "__main__":
    key = jax.random.PRNGKey(0)
    k0, k1 = jax.random.split(key)

    # parameters matching nn.Parameter(torch.Tensor([sigma])) / ([epsilon])
    sigma = jnp.array([1.0], dtype=jnp.float32)
    epsilon = jnp.array([1.0], dtype=jnp.float32)

    # small NCHW-like input; values kept away from 0 (physical distances r > 0)
    x = jax.random.uniform(
        k0, (2, 4, 16, 16), dtype=jnp.float32, minval=0.8, maxval=2.5
    )

    # force the Pallas kernel path (default would take the tiny-input fast path)
    out = lennard_jones(x, sigma, epsilon, min_kernel_bytes=0)
    out = jax.block_until_ready(out)
    ref = lennard_jones_ref(x, sigma, epsilon)
    assert out.shape == x.shape
    assert out.dtype == x.dtype
    assert jnp.allclose(out, ref, rtol=1e-5, atol=1e-5), "mismatch vs reference"

    # non-lane-aligned shape: aligned prefix through the kernel, tail via jnp
    x2 = jax.random.uniform(k1, (5, 130), dtype=jnp.float32,
                            minval=0.8, maxval=2.5)
    out2 = jax.block_until_ready(
        lennard_jones(x2, sigma, epsilon, min_kernel_bytes=0))
    assert jnp.allclose(out2, lennard_jones_ref(x2, sigma, epsilon),
                        rtol=1e-5, atol=1e-5), "mismatch (unaligned) vs reference"

    # default call uses the small-input jnp fast path; must agree too
    out_fast = jax.block_until_ready(lennard_jones(x, sigma, epsilon))
    assert jnp.allclose(out_fast, ref, rtol=1e-5, atol=1e-5), "fast path mismatch"

    print("KERNEL_OK")
</pallas_src>

<mosaic_0001>
module attributes {stable_mosaic.version = 11 : i64} {
  func.func @_lj_kernel(%arg0: i32, %arg1: memref<1xf32, #tpu.memory_space<smem>>, %arg2: memref<1xf32, #tpu.memory_space<smem>>, %arg3: memref<16x128xf32, #tpu.memory_space<vmem>>, %arg4: memref<16x128xf32, #tpu.memory_space<vmem>>) attributes {dimension_semantics = [#tpu.dimension_semantics<parallel>], iteration_bounds = array<i64: 1>, scalar_prefetch = 0 : i64, scratch_operands = 0 : i64, tpu.core_type = #tpu.core_type<tc>, window_params = [{transform_indices = @transform_0, window_bounds = array<i64: 1>}, {transform_indices = @transform_1, window_bounds = array<i64: 1>}, {transform_indices = @transform_2, window_bounds = array<i64: 16, 128>}, {transform_indices = @transform_3, window_bounds = array<i64: 16, 128>}]} {
    %c0 = arith.constant 0 : index
    %0 = memref.load %arg1[%c0] : memref<1xf32, #tpu.memory_space<smem>>
    %c0_0 = arith.constant 0 : index
    %1 = memref.load %arg2[%c0_0] : memref<1xf32, #tpu.memory_space<smem>>
    %cst = arith.constant 4.000000e+00 : f32
    %2 = arith.mulf %cst, %1 : f32
    %c0_1 = arith.constant 0 : index
    %c0_2 = arith.constant 0 : index
    %3 = vector.load %arg3[%c0_1, %c0_2] : memref<16x128xf32, #tpu.memory_space<vmem>>, vector<16x128xf32>
    %4 = vector.broadcast %0 : f32 to vector<16x128xf32>
    %5 = arith.divf %4, %3 : vector<16x128xf32>
    %6 = arith.mulf %5, %5 : vector<16x128xf32>
    %7 = arith.mulf %6, %6 : vector<16x128xf32>
    %8 = arith.mulf %7, %6 : vector<16x128xf32>
    %9 = vector.broadcast %2 : f32 to vector<16x128xf32>
    %10 = arith.mulf %9, %8 : vector<16x128xf32>
    %cst_3 = arith.constant 1.000000e+00 : f32
    %11 = vector.broadcast %cst_3 : f32 to vector<16x128xf32>
    %12 = arith.subf %8, %11 : vector<16x128xf32>
    %13 = arith.mulf %10, %12 : vector<16x128xf32>
    %c0_4 = arith.constant 0 : index
    %c0_5 = arith.constant 0 : index
    %14 = vector.load %arg4[%c0_4, %c0_5] : memref<16x128xf32, #tpu.memory_space<vmem>>, vector<16x128xf32>
    tpu.vector_store %arg4[%c0_4, %c0_5], %13 {strides = array<i32>} : memref<16x128xf32, #tpu.memory_space<vmem>>, vector<16x128xf32>,
    return
  }
  func.func @transform_0(%arg0: i32) -> i32 {
    %c0_i32 = arith.constant 0 : i32
    %c0_i32_0 = arith.constant 0 : i32
    return %c0_i32 : i32
  }
  func.func @transform_1(%arg0: i32) -> i32 {
    %c0_i32 = arith.constant 0 : i32
    %c0_i32_0 = arith.constant 0 : i32
    return %c0_i32 : i32
  }
  func.func @transform_2(%arg0: i32) -> (i32, i32) {
    %c0_i32 = arith.constant 0 : i32
    %c0_i32_0 = arith.constant 0 : i32
    return %arg0, %c0_i32 : i32, i32
  }
  func.func @transform_3(%arg0: i32) -> (i32, i32) {
    %c0_i32 = arith.constant 0 : i32
    %c0_i32_0 = arith.constant 0 : i32
    return %arg0, %c0_i32 : i32, i32
  }
}

</mosaic_0001>

<llo_original>
// kernel: tpu_custom_call.1
$region0: #{tpu_custom_call.1}
  #allocation0 [shape = 'u32[]', space=smem, size = 0x4, offset = 0x4, fixed_abs, tag = 'smem constant byte address 0x4 - core index']
  #allocation1 [shape = 'u32[144,128]{1,0:T(1,128)}', space=vmem, size = 0x12000, scoped, tag = 'internal scratch']
  #allocation2 [shape = 'f32[1]{0:T(128)S(6)}', space=smem, size = 0x200, scoped, tag = 'scoped memory for tpu_custom_call.1']
  #allocation3 [shape = 'f32[1]{0:T(128)S(6)}', space=smem, size = 0x200, scoped, tag = 'scoped memory for tpu_custom_call.1']
  %s0 = inlined_call_operand.<no memory space> [shape: f32[1], index: 0, kind: input, shape index: {}]
  %s1 = inlined_call_operand.<no memory space> [shape: f32[1], index: 1, kind: input, shape index: {}]
  %s2 = inlined_call_operand.hbm [shape: f32[16,128], index: 2, kind: input, shape index: {}]
  %s3 = inlined_call_operand.hbm [shape: f32[16,128], index: 3, kind: output, shape index: {}]
  %s4 = sld [smem:[#allocation0]]
  $region26: #{tpu_custom_call.1} parent=0
    _
  %s6 = ssub.s32 1, %s4
  %s7 = scalar_select 0, %s6, %s4
  %8 = sst [smem:[#allocation2]] %s0
  %9 = sst [smem:[#allocation3]] %s1
  $region1: #{tpu_custom_call.1} parent=0
    #allocation4 [shape = 'u8[8192]{0}', space=vmem, size = 0x2000, scoped, tag = 'input window, operand 2, single buffered']
    #allocation5 [shape = 's32[1]{0}', space=sflag, size = 0x4, scoped, tag = 'scoped memory for tpu_custom_call.1']
    #allocation6 [shape = 's32[1]{0}', space=sflag, size = 0x4, scoped, tag = 'scoped memory for tpu_custom_call.1']
    #allocation7 [shape = 'u8[8192]{0}', space=vmem, size = 0x2000, scoped, tag = 'output window, operand 0, single buffered']
    %10 = vsyncpa [#allocation5], 0
    %11 = vsyncpa [#allocation6], 0
    // Predicated region
    $region2: #{tpu_custom_call.1} parent=1 // pred_check
      _
    $region3: #{tpu_custom_call.1} parent=1 // pred_check_branch
      %13 = sbr.rel (0) target = $region5
    $region4: #{tpu_custom_call.1} parent=1 // pred_region
      _
    $region5: #{tpu_custom_call.1} parent=1 // pred_fallthru
      _
    // Predicated region
    $region6: #{tpu_custom_call.1} parent=1 // pred_check
      _
    $region7: #{tpu_custom_call.1} parent=1 // pred_check_branch
      %15 = sbr.rel (0) target = $region9
    $region8: #{tpu_custom_call.1} parent=1 // pred_region
      _
    $region9: #{tpu_custom_call.1} parent=1 // pred_fallthru
      _
    // Predicated region
    $region10: #{tpu_custom_call.1} parent=1 // pred_check
      _
    $region11: #{tpu_custom_call.1} parent=1 // pred_check_branch
      %17 = sbr.rel (0) target = $region13
    $region12: #{tpu_custom_call.1} parent=1 // pred_region
      %s19 = ssub.s32 256, 256
      %20 = vsyncadd [#allocation5], %s19
      %s21 = sshll.u32 [#allocation4], 4
      %s22 = int_to_ptr.vmem [resolvable:$true] %s21
      %27 = dma.hbm_to_vmem [thread:$0]  %s2, 256, %s22, [#allocation5], 128, 128, 8
    $region13: #{tpu_custom_call.1} parent=1 // pred_fallthru
      _
    // Predicated region
    $region14: #{tpu_custom_call.1} parent=1 // pred_check
      _
    $region15: #{tpu_custom_call.1} parent=1 // pred_check_branch
      %29 = sbr.rel (0) target = $region17
    $region16: #{tpu_custom_call.1} parent=1 // pred_region
      %30 = dma.done [#allocation5], 256
    $region17: #{tpu_custom_call.1} parent=1 // pred_fallthru
      _
    %s31 = sld [smem:[#allocation2]]
    %s32 = sld [smem:[#allocation3]]
    %s33 = smul.f32 %s32, 4.0
    %v34 = vld [vmem:[#allocation4] sm:$0xff]
    %v35 = vld [vmem:[#allocation4 + $0x8] sm:$0xff]
    %v36 = vstv %s31
    %v37 = vrcp.pop %v34
    %v38 = vmul.f32 %v36, %v37
    %v39 = vrcp.pop %v35
    %v40 = vmul.f32 %v36, %v39
    %v41 = vmul.f32 %v38, %v38
    %v42 = vmul.f32 %v40, %v40
    %v43 = vmul.f32 %v41, %v41
    %v44 = vmul.f32 %v42, %v42
    %v45 = vmul.f32 %v43, %v41
    %v46 = vmul.f32 %v44, %v42
    %v47 = vstv %s33
    %v48 = vmul.f32 %v47, %v45
    %v49 = vmul.f32 %v47, %v46
    %v50 = vsub.f32 %v45, 1.0
    %v51 = vsub.f32 %v46, 1.0
    %v52 = vmul.f32 %v48, %v50
    %v53 = vmul.f32 %v49, %v51
    %54 = vst [vmem:[#allocation7] sm:$0xff] %v52
    %55 = vst [vmem:[#allocation7 + $0x8] sm:$0xff] %v53
    // Predicated region
    $region18: #{tpu_custom_call.1} parent=1 // pred_check
      _
    $region19: #{tpu_custom_call.1} parent=1 // pred_check_branch
      %57 = sbr.rel (0) target = $region21
    $region20: #{tpu_custom_call.1} parent=1 // pred_region
      %s59 = ssub.s32 256, 256
      %60 = vsyncadd [#allocation6], %s59
      %s61 = sshll.u32 [#allocation7], 4
      %s62 = int_to_ptr.vmem [resolvable:$true] %s61
      %67 = dma.vmem_to_hbm [thread:$0]  %s62, 256, %s3, [#allocation6], 128, 128, 8
    $region21: #{tpu_custom_call.1} parent=1 // pred_fallthru
      _
    // Predicated region
    $region22: #{tpu_custom_call.1} parent=1 // pred_check
      _
    $region23: #{tpu_custom_call.1} parent=1 // pred_check_branch
      %69 = sbr.rel (0) target = $region25
    $region24: #{tpu_custom_call.1} parent=1 // pred_region
      %70 = dma.done [#allocation6], 256
    $region25: #{tpu_custom_call.1} parent=1 // pred_fallthru
      _
    %71 = vsyncpa [#allocation5], 1
    %72 = vsyncpa [#allocation6], 1

</llo_original>
